<compile_context>
chip_gen: v7x
topology: tpu7x:2x2x1
jax: 0.10.0
libtpu: 0.0.40
codegen_flags: <defaults>
</compile_context>

<pallas_src>
import functools

import jax
import jax.numpy as jnp
from jax.experimental import pallas as pl
from jax.experimental.pallas import tpu as pltpu


def _round_up(x, m):
    return ((x + m - 1) // m) * m


def _cdiv(a, b):
    return -(-a // b)


def _vmem_capacity_bytes():
    """Physical VMEM per core, with a conservative fallback."""
    try:
        cap = getattr(pltpu.get_tpu_info(), "vmem_capacity_bytes", None)
        if cap:
            return int(cap)
    except Exception:
        pass
    return 128 * 1024 * 1024


def regression_head_kernel(x_ref, w1_ref, b1_ref, w2_ref, b2_ref, o_ref, acc_ref):
    k = pl.program_id(1)

    @pl.when(k == 0)
    def _():
        acc_ref[...] = jnp.zeros_like(acc_ref)

    # Layer 1 (partial over D): cast the x tile to bf16 on the VPU, matmul on the MXU,
    # accumulate in f32.
    acc_ref[...] += jnp.dot(
        x_ref[...].astype(jnp.bfloat16),
        w1_ref[...],
        preferred_element_type=jnp.float32,
    )

    @pl.when(k == pl.num_programs(1) - 1)
    def _():
        # Bias + ReLU on the VPU.
        h = jnp.maximum(acc_ref[...] + b1_ref[...], 0.0)
        # Layer 2 as (1, Hp) . (tb, Hp)^T -> (1, tb): lane-dense row (MXU has slack).
        row = jax.lax.dot_general(
            w2_ref[...], h,
            dimension_numbers=(((1,), (1,)), ((), ())),
            preferred_element_type=jnp.float32,
        ) + b2_ref[0, 0]
        o_ref[...] = row.reshape(o_ref.shape).astype(o_ref.dtype)


@functools.partial(jax.jit, static_argnames=("block_b",))
def regression_head(x, w1, b1, w2, b2, *, block_b=1024):
    """x: (B, D); w1: (D, H); b1: (1, H); w2: (H, 1); b2: (1, 1) -> (B, 1)."""
    B, D = x.shape
    H = w1.shape[1]
    out_dtype = x.dtype
    itemsize = x.dtype.itemsize

    # ---- generation-aware VMEM budget ------------------------------------------
    vmem_ceiling = min(96 * 1024 * 1024, _vmem_capacity_bytes() - 12 * 1024 * 1024)
    vmem_ceiling = max(vmem_ceiling, 16 * 1024 * 1024)

    # ---- lane-align hidden dim (weights tiny & resident; one-time pad) ----------
    Hp = _round_up(H, 128)
    w1p = jnp.pad(w1, ((0, 0), (0, Hp - H))).astype(jnp.bfloat16)
    b1p = jnp.pad(b1.reshape(1, H), ((0, 0), (0, Hp - H))).astype(jnp.float32)
    w2p = jnp.pad(w2.reshape(1, H), ((0, 0), (0, Hp - H))).astype(jnp.float32)
    b2s = b2.reshape(1, 1).astype(jnp.float32)

    # ---- K-tiling only if the resident (double-buffered) w1 blows the budget ----
    w1_bytes = 2 * D * Hp * 2
    w1_budget = max((vmem_ceiling * 2) // 5, 4 * 1024 * 1024)
    if w1_bytes <= w1_budget:
        nk, tk = 1, D
    else:
        nk = _cdiv(w1_bytes, w1_budget)
        tk = _round_up(_cdiv(D, nk), 128)
        nk = _cdiv(D, tk)
        if nk * tk != D:
            # Rare fallback (huge, non-128-aligned D): zero-pad the contraction dim so
            # the ragged K tile cannot pollute the accumulator.
            Dp = nk * tk
            x = jnp.pad(x, ((0, 0), (0, Dp - D)))
            w1p = jnp.pad(w1p, ((0, Dp - D), (0, 0)))

    # ---- batch tile: biggest that fits VMEM; >= 2 tiles when possible (v7x 2 TCs) -
    fixed_bytes = 2 * tk * Hp * 2 + 2 * 2 * 8 * Hp * 4 + 64 * 1024

    def _per_tile_bytes(t):
        return (2 * t * tk * itemsize              # double-buffered x tiles (orig dtype)
                + t * Hp * 4                       # f32 accumulator scratch
                + 2 * 8 * _round_up(t, 128) * 4)   # double-buffered padded out blocks

    tb = _round_up(min(block_b, _round_up(B, 8)), 8)
    while tb > 8 and fixed_bytes + _per_tile_bytes(tb) > (vmem_ceiling * 9) // 10:
        tb = _round_up(tb // 2, 8)
    if _cdiv(B, tb) < 2 and B > 8:
        tb = _round_up(_cdiv(B, 2), 8)
    num_b_tiles = _cdiv(B, tb)

    cost = pl.CostEstimate(
        flops=int(2 * B * D * Hp + 6 * B * Hp),
        transcendentals=0,
        bytes_accessed=int(B * D * itemsize + D * Hp * 2 + 2 * Hp * 4 + 4 + B * 4),
    )

    vmem_need = fixed_bytes + _per_tile_bytes(tb)
    compiler_params = pltpu.CompilerParams(
        dimension_semantics=("parallel", "arbitrary"),
        vmem_limit_bytes=int(min(vmem_ceiling,
                                 max((vmem_need * 5) // 4, 24 * 1024 * 1024))),
    )

    out = pl.pallas_call(
        regression_head_kernel,
        out_shape=jax.ShapeDtypeStruct((num_b_tiles, 1, tb), out_dtype),
        grid=(num_b_tiles, nk),
        in_specs=[
            pl.BlockSpec((tb, tk), lambda i, k: (i, k)),        # x: pipelined tiles
            pl.BlockSpec((tk, Hp), lambda i, k: (0, k)),        # w1: resident when nk==1
            pl.BlockSpec((1, Hp), lambda i, k: (0, 0)),         # b1: resident
            pl.BlockSpec((1, Hp), lambda i, k: (0, 0)),         # w2 row: resident
            pl.BlockSpec(memory_space=pltpu.MemorySpace.SMEM),  # b2 scalar
        ],
        out_specs=pl.BlockSpec((1, 1, tb), lambda i, k: (i, 0, 0)),
        scratch_shapes=[pltpu.VMEM((tb, Hp), jnp.float32)],
        compiler_params=compiler_params,
        cost_estimate=cost,
    )(x, w1p, b1p, w2p, b2s)

    # (num_tiles, 1, tb) lane-dense slab -> (B, 1); ragged-tail garbage is sliced off.
    return out.reshape(num_b_tiles * tb)[:B].reshape(B, 1)


def init_params(key, d_embedding):
    """Deterministic init mimicking nn.Linear default (uniform +-1/sqrt(fan_in))."""
    h = d_embedding // 2
    k1, k2, k3, k4 = jax.random.split(key, 4)
    bound1 = 1.0 / jnp.sqrt(d_embedding)
    bound2 = 1.0 / jnp.sqrt(h)
    # Stored already transposed relative to PyTorch's (out, in) convention.
    w1 = jax.random.uniform(k1, (d_embedding, h), jnp.float32, -bound1, bound1)
    b1 = jax.random.uniform(k2, (1, h), jnp.float32, -bound1, bound1)
    w2 = jax.random.uniform(k3, (h, 1), jnp.float32, -bound2, bound2)
    b2 = jax.random.uniform(k4, (1, 1), jnp.float32, -bound2, bound2)
    return w1, b1, w2, b2


if __name__ == "__main__":
    d_embedding = 32
    batch = 40          # deliberately not a multiple of the tile -> exercises ragged tile
    block_b = 16        # small tile so the demo runs a multi-step grid (3 batch tiles)

    key = jax.random.PRNGKey(0)
    kx, kp = jax.random.split(key)
    x = jax.random.normal(kx, (batch, d_embedding), jnp.float32)
    w1, b1, w2, b2 = init_params(kp, d_embedding)

    out = regression_head(x, w1, b1, w2, b2, block_b=block_b)
    out = jax.block_until_ready(out)

    # Reference in plain f32 JAX (kernel uses bf16 layer-1 matmul -> relaxed tolerance).
    ref = jnp.maximum(x @ w1 + b1, 0.0) @ w2 + b2
    assert out.shape == (batch, 1)
    assert jnp.allclose(out, ref, atol=3e-2, rtol=3e-2), (
        float(jnp.max(jnp.abs(out - ref)))
    )

    print("KERNEL_OK")
</pallas_src>

<mosaic_0001>
module attributes {stable_mosaic.version = 11 : i64} {
  func.func @regression_head_kernel(%arg0: i32, %arg1: i32, %arg2: memref<16x32xf32, #tpu.memory_space<vmem>>, %arg3: memref<32x128xbf16, #tpu.memory_space<vmem>>, %arg4: memref<1x128xf32, #tpu.memory_space<vmem>>, %arg5: memref<1x128xf32, #tpu.memory_space<vmem>>, %arg6: memref<1x1xf32, #tpu.memory_space<smem>>, %arg7: memref<1x1x16xf32, #tpu.memory_space<vmem>>, %arg8: memref<16x128xf32, #tpu.memory_space<vmem>>) attributes {dimension_semantics = [#tpu.dimension_semantics<parallel>, #tpu.dimension_semantics<arbitrary>], iteration_bounds = array<i64: 3, 1>, scalar_prefetch = 0 : i64, scratch_operands = 1 : i64, tpu.core_type = #tpu.core_type<tc>, window_params = [{transform_indices = @transform_0, window_bounds = array<i64: 16, 32>}, {transform_indices = @transform_1, window_bounds = array<i64: 32, 128>}, {pipeline_mode = #tpu.pipeline_mode<synchronous>, transform_indices = @transform_2, window_bounds = array<i64: 1, 128>}, {pipeline_mode = #tpu.pipeline_mode<synchronous>, transform_indices = @transform_3, window_bounds = array<i64: 1, 128>}, {transform_indices = @transform_4, window_bounds = array<i64: 1, 1>}, {transform_indices = @transform_5, window_bounds = array<i64: 1, 1, 16>}]} {
    %c0_i32 = arith.constant 0 : i32
    %0 = arith.cmpi eq, %arg1, %c0_i32 : i32
    %1 = arith.extui %0 : i1 to i32
    %c0_i32_0 = arith.constant 0 : i32
    %2 = arith.cmpi ne, %1, %c0_i32_0 : i32
    scf.if %2 {
      %cst_10 = arith.constant 0.000000e+00 : f32
      %13 = vector.broadcast %cst_10 : f32 to vector<16x128xf32>
      %c0_11 = arith.constant 0 : index
      %c0_12 = arith.constant 0 : index
      %14 = vector.load %arg8[%c0_11, %c0_12] : memref<16x128xf32, #tpu.memory_space<vmem>>, vector<16x128xf32>
      tpu.vector_store %arg8[%c0_11, %c0_12], %13 {strides = array<i32>} : memref<16x128xf32, #tpu.memory_space<vmem>>, vector<16x128xf32>,
    } else {
    }
    %c0 = arith.constant 0 : index
    %c0_1 = arith.constant 0 : index
    %3 = vector.load %arg8[%c0, %c0_1] : memref<16x128xf32, #tpu.memory_space<vmem>>, vector<16x128xf32>
    %c0_2 = arith.constant 0 : index
    %c0_3 = arith.constant 0 : index
    %4 = vector.load %arg2[%c0_2, %c0_3] : memref<16x32xf32, #tpu.memory_space<vmem>>, vector<16x32xf32>
    %5 = arith.truncf %4 : vector<16x32xf32> to vector<16x32xbf16>
    %c0_4 = arith.constant 0 : index
    %c0_5 = arith.constant 0 : index
    %6 = vector.load %arg3[%c0_4, %c0_5] : memref<32x128xbf16, #tpu.memory_space<vmem>>, vector<32x128xbf16>
    %cst = arith.constant dense<0.000000e+00> : vector<16x128xf32>
    %7 = tpu.matmul %5, %6, %cst {dimension_numbers = #tpu.dot_dimension_numbers<[1], [0], [0], [1], [0, 0, 1, 1], [], []>} : vector<16x32xbf16>, vector<32x128xbf16>, vector<16x128xf32> -> vector<16x128xf32>
    %8 = arith.addf %3, %7 : vector<16x128xf32>
    %c0_6 = arith.constant 0 : index
    %c0_7 = arith.constant 0 : index
    %9 = vector.load %arg8[%c0_6, %c0_7] : memref<16x128xf32, #tpu.memory_space<vmem>>, vector<16x128xf32>
    tpu.vector_store %arg8[%c0_6, %c0_7], %8 {strides = array<i32>} : memref<16x128xf32, #tpu.memory_space<vmem>>, vector<16x128xf32>,
    %c0_i32_8 = arith.constant 0 : i32
    %10 = arith.cmpi eq, %arg1, %c0_i32_8 : i32
    %11 = arith.extui %10 : i1 to i32
    %c0_i32_9 = arith.constant 0 : i32
    %12 = arith.cmpi ne, %11, %c0_i32_9 : i32
    scf.if %12 {
      %c0_10 = arith.constant 0 : index
      %c0_11 = arith.constant 0 : index
      %13 = vector.load %arg8[%c0_10, %c0_11] : memref<16x128xf32, #tpu.memory_space<vmem>>, vector<16x128xf32>
      %c0_12 = arith.constant 0 : index
      %c0_13 = arith.constant 0 : index
      %14 = vector.load %arg4[%c0_12, %c0_13] : memref<1x128xf32, #tpu.memory_space<vmem>>, vector<1x128xf32>
      %15 = vector.broadcast %14 : vector<1x128xf32> to vector<16x128xf32>
      %16 = arith.addf %13, %15 : vector<16x128xf32>
      %cst_14 = arith.constant 0.000000e+00 : f32
      %17 = vector.broadcast %cst_14 : f32 to vector<16x128xf32>
      %18 = arith.maximumf %16, %17 : vector<16x128xf32>
      %c0_15 = arith.constant 0 : index
      %c0_16 = arith.constant 0 : index
      %19 = vector.load %arg5[%c0_15, %c0_16] : memref<1x128xf32, #tpu.memory_space<vmem>>, vector<1x128xf32>
      %cst_17 = arith.constant dense<0.000000e+00> : vector<1x16xf32>
      %20 = tpu.matmul %19, %18, %cst_17 {dimension_numbers = #tpu.dot_dimension_numbers<[1], [1], [0], [0], [0, 0, 1, 0], [], []>} : vector<1x128xf32>, vector<16x128xf32>, vector<1x16xf32> -> vector<1x16xf32>
      %c0_18 = arith.constant 0 : index
      %c0_19 = arith.constant 0 : index
      %21 = memref.load %arg6[%c0_18, %c0_19] : memref<1x1xf32, #tpu.memory_space<smem>>
      %22 = vector.broadcast %21 : f32 to vector<1x16xf32>
      %23 = arith.addf %20, %22 : vector<1x16xf32>
      %24 = vector.shape_cast %23 : vector<1x16xf32> to vector<1x1x16xf32>
      %c0_20 = arith.constant 0 : index
      %c0_21 = arith.constant 0 : index
      %c0_22 = arith.constant 0 : index
      %25 = vector.load %arg7[%c0_20, %c0_21, %c0_22] : memref<1x1x16xf32, #tpu.memory_space<vmem>>, vector<1x1x16xf32>
      tpu.vector_store %arg7[%c0_20, %c0_21, %c0_22], %24 {strides = array<i32>} : memref<1x1x16xf32, #tpu.memory_space<vmem>>, vector<1x1x16xf32>,
    } else {
    }
    return
  }
  func.func @transform_0(%arg0: i32, %arg1: i32) -> (i32, i32) {
    %c0_i32 = arith.constant 0 : i32
    return %arg0, %arg1 : i32, i32
  }
  func.func @transform_1(%arg0: i32, %arg1: i32) -> (i32, i32) {
    %c0_i32 = arith.constant 0 : i32
    %c0_i32_0 = arith.constant 0 : i32
    return %c0_i32, %arg1 : i32, i32
  }
  func.func @transform_2(%arg0: i32, %arg1: i32) -> (i32, i32) {
    %c0_i32 = arith.constant 0 : i32
    %c0_i32_0 = arith.constant 0 : i32
    %c0_i32_1 = arith.constant 0 : i32
    return %c0_i32, %c0_i32_0 : i32, i32
  }
  func.func @transform_3(%arg0: i32, %arg1: i32) -> (i32, i32) {
    %c0_i32 = arith.constant 0 : i32
    %c0_i32_0 = arith.constant 0 : i32
    %c0_i32_1 = arith.constant 0 : i32
    return %c0_i32, %c0_i32_0 : i32, i32
  }
  func.func @transform_4(%arg0: i32, %arg1: i32) -> (i32, i32) {
    %c0_i32 = arith.constant 0 : i32
    %c0_i32_0 = arith.constant 0 : i32
    %c0_i32_1 = arith.constant 0 : i32
    return %c0_i32, %c0_i32_0 : i32, i32
  }
  func.func @transform_5(%arg0: i32, %arg1: i32) -> (i32, i32, i32) {
    %c0_i32 = arith.constant 0 : i32
    %c0_i32_0 = arith.constant 0 : i32
    %c0_i32_1 = arith.constant 0 : i32
    return %arg0, %c0_i32, %c0_i32_0 : i32, i32, i32
  }
}

</mosaic_0001>

<llo_original>
// kernel: regression_head.1
$region0: #{regression_head.1}
  #allocation0 [shape = 'u32[]', space=smem, size = 0x4, offset = 0x4, fixed_abs, tag = 'smem constant byte address 0x4 - core index']
  #allocation1 [shape = 'u32[144,128]{1,0:T(1,128)}', space=vmem, size = 0x12000, scoped, tag = 'internal scratch']
  #allocation2 [shape = 'f32[16,128]{1,0:T(8,128)}', space=vmem, size = 0x2000, scoped, tag = 'scratch operand']
  #allocation3 [shape = 'f32[1,1]{1,0:T(1,128)S(6)}', space=smem, size = 0x200, scoped, tag = 'scoped memory for regression_head.1']
  %s0 = inlined_call_operand.vmem [shape: f32[40,32], index: 0, kind: input, shape index: {}]
  %s1 = inlined_call_operand.vmem [shape: bf16[32,128], index: 1, kind: input, shape index: {}]
  %s2 = inlined_call_operand.vmem [shape: f32[1,128], index: 2, kind: input, shape index: {}]
  %s3 = inlined_call_operand.vmem [shape: f32[1,128], index: 3, kind: input, shape index: {}]
  %s4 = inlined_call_operand.<no memory space> [shape: f32[1,1], index: 4, kind: input, shape index: {}]
  %s5 = inlined_call_operand.vmem [shape: f32[3,1,16], index: 5, kind: output, shape index: {}]
  %s6 = sld [smem:[#allocation0]]
  $region61: #{regression_head.1} parent=0
    _
  %s8 = ssub.s32 1, %s6
  %s9 = scalar_select 0, %s8, %s6
  %10 = sst [smem:[#allocation3]] %s4
  loop: start=0, step=1, limit=5
  $region2: #{regression_head.1} parent=0 // loop_pre_header
    _
  $region3: #{regression_head.1} parent=0 // loop_header
    %s12 = sphi 0, %s16
    %p13 = scmp.ge.s32.totalorder %s12, 5
    %s19 = sphi 0, %s31
    %s20 = sphi 0, %s27
    %s21 = sphi 0, %s19
    %s22 = sphi 0, %s20
    %s23 = sphi 0, %s21
    %s24 = sphi 0, %s22
    %s36 = sphi 0, %s38
    %s39 = sphi 0, %s36
    %s40 = sphi 0, %s39
    %s56 = sphi 0, %s40
    %s62 = sphi 0, %s64
    %s65 = sphi 0, %s62
    %s66 = sphi 0, %s65
    %s82 = sphi 0, %s66
    %s86 = sphi 0, %s86
    %s88 = sphi 0, %s86
    %s89 = sphi 0, %s88
    %s103 = sphi 0, %s89
    %s107 = sphi 0, %s107
    %s109 = sphi 0, %s107
    %s110 = sphi 0, %s109
    %s124 = sphi 0, %s110
    %s128 = sphi 0, %s128
    %s130 = sphi 0, %s128
    %s131 = sphi 0, %s130
    %s145 = sphi 0, %s131
    %s151 = sphi 0, %s153
    %s154 = sphi 0, %s151
    %s155 = sphi 0, %s154
    %s171 = sphi 0, %s155
  $region4: #{regression_head.1} parent=0 // loop_header_branch
    %15 = sbr.rel (%p13) target = $region8
  $region5: #{regression_head.1} parent=0 // loop_body
    %s17 = ssub.s32 %s12, 1
    %s18 = ssub.s32 %s12, 2
    %s25 = sadd.s32 1, %s20
    %p26 = scmp.ge.s32.totalorder %s25, 1
    %s27 = scalar_select %p26, 0, %s25
    %s28 = sadd.s32 1, %s19
    %s29 = scalar_select %p26, %s28, %s19
    %p30 = scmp.ge.s32.totalorder %s29, 3
    %s31 = scalar_select %p30, 0, %s29
    %s32 = ssub.s32 %s19, %s31
    %s33 = ssub.s32 %s20, %s27
    %s34 = sor.u32 %s32, %s33
    %p35 = scmp.eq.s32.totalorder %s34, 0
    %s37 = sadd.s32 %s36, 1
    %s38 = scalar_select %p35, %s36, %s37
    %p41 = pneg %p35
    %p42 = scmp.eq.s32.totalorder %s12, 2
    %p43 = por %p41, %p42
    %p44 = scmp.ne.s32.totalorder %s36, %s39
    %p45 = scmp.eq.s32.totalorder %s12, 0
    %p46 = por %p44, %p45
    %p47 = scmp.ne.s32.totalorder %s36, %s39
    %p48 = scmp.eq.s32.totalorder %s17, 2
    %p49 = por %p47, %p48
    %p50 = scmp.ne.s32.totalorder %s39, %s40
    %p51 = scmp.eq.s32.totalorder %s17, 0
    %p52 = por %p50, %p51
    %p53 = scmp.ne.s32.totalorder %s39, %s40
    %p54 = scmp.eq.s32.totalorder %s18, 2
    %p55 = por %p53, %p54
    %p57 = scmp.ne.s32.totalorder %s40, %s56
    %p58 = scmp.eq.s32.totalorder %s18, 0
    %p59 = por %p57, %p58
    %s60 = ssub.s32 %s20, %s27
    %p61 = scmp.eq.s32.totalorder %s60, 0
    %s63 = sadd.s32 %s62, 1
    %s64 = scalar_select %p61, %s62, %s63
    %p67 = pneg %p61
    %p68 = scmp.eq.s32.totalorder %s12, 2
    %p69 = por %p67, %p68
    %p70 = scmp.ne.s32.totalorder %s62, %s65
    %p71 = scmp.eq.s32.totalorder %s12, 0
    %p72 = por %p70, %p71
    %p73 = scmp.ne.s32.totalorder %s62, %s65
    %p74 = scmp.eq.s32.totalorder %s17, 2
    %p75 = por %p73, %p74
    %p76 = scmp.ne.s32.totalorder %s65, %s66
    %p77 = scmp.eq.s32.totalorder %s17, 0
    %p78 = por %p76, %p77
    %p79 = scmp.ne.s32.totalorder %s65, %s66
    %p80 = scmp.eq.s32.totalorder %s18, 2
    %p81 = por %p79, %p80
    %p83 = scmp.ne.s32.totalorder %s66, %s82
    %p84 = scmp.eq.s32.totalorder %s18, 0
    %p85 = por %p83, %p84
    %s87 = sadd.s32 %s86, 1
    %p90 = scmp.eq.s32.totalorder %s12, 2
    %p91 = scmp.ne.s32.totalorder %s86, %s88
    %p92 = scmp.eq.s32.totalorder %s12, 0
    %p93 = por %p91, %p92
    %p94 = scmp.ne.s32.totalorder %s86, %s88
    %p95 = scmp.eq.s32.totalorder %s17, 2
    %p96 = por %p94, %p95
    %p97 = scmp.ne.s32.totalorder %s88, %s89
    %p98 = scmp.eq.s32.totalorder %s17, 0
    %p99 = por %p97, %p98
    %p100 = scmp.ne.s32.totalorder %s88, %s89
    %p101 = scmp.eq.s32.totalorder %s18, 2
    %p102 = por %p100, %p101
    %p104 = scmp.ne.s32.totalorder %s89, %s103
    %p105 = scmp.eq.s32.totalorder %s18, 0
    %p106 = por %p104, %p105
    %s108 = sadd.s32 %s107, 1
    %p111 = scmp.eq.s32.totalorder %s12, 2
    %p112 = scmp.ne.s32.totalorder %s107, %s109
    %p113 = scmp.eq.s32.totalorder %s12, 0
    %p114 = por %p112, %p113
    %p115 = scmp.ne.s32.totalorder %s107, %s109
    %p116 = scmp.eq.s32.totalorder %s17, 2
    %p117 = por %p115, %p116
    %p118 = scmp.ne.s32.totalorder %s109, %s110
    %p119 = scmp.eq.s32.totalorder %s17, 0
    %p120 = por %p118, %p119
    %p121 = scmp.ne.s32.totalorder %s109, %s110
    %p122 = scmp.eq.s32.totalorder %s18, 2
    %p123 = por %p121, %p122
    %p125 = scmp.ne.s32.totalorder %s110, %s124
    %p126 = scmp.eq.s32.totalorder %s18, 0
    %p127 = por %p125, %p126
    %s129 = sadd.s32 %s128, 1
    %p132 = scmp.eq.s32.totalorder %s12, 2
    %p133 = scmp.ne.s32.totalorder %s128, %s130
    %p134 = scmp.eq.s32.totalorder %s12, 0
    %p135 = por %p133, %p134
    %p136 = scmp.ne.s32.totalorder %s128, %s130
    %p137 = scmp.eq.s32.totalorder %s17, 2
    %p138 = por %p136, %p137
    %p139 = scmp.ne.s32.totalorder %s130, %s131
    %p140 = scmp.eq.s32.totalorder %s17, 0
    %p141 = por %p139, %p140
    %p142 = scmp.ne.s32.totalorder %s130, %s131
    %p143 = scmp.eq.s32.totalorder %s18, 2
    %p144 = por %p142, %p143
    %p146 = scmp.ne.s32.totalorder %s131, %s145
    %p147 = scmp.eq.s32.totalorder %s18, 0
    %p148 = por %p146, %p147
    %s149 = ssub.s32 %s19, %s31
    %p150 = scmp.eq.s32.totalorder %s149, 0
    %s152 = sadd.s32 %s151, 1
    %s153 = scalar_select %p150, %s151, %s152
    %p156 = pneg %p150
    %p157 = scmp.eq.s32.totalorder %s12, 2
    %p158 = por %p156, %p157
    %p159 = scmp.ne.s32.totalorder %s151, %s154
    %p160 = scmp.eq.s32.totalorder %s12, 0
    %p161 = por %p159, %p160
    %p162 = scmp.ne.s32.totalorder %s151, %s154
    %p163 = scmp.eq.s32.totalorder %s17, 2
    %p164 = por %p162, %p163
    %p165 = scmp.ne.s32.totalorder %s154, %s155
    %p166 = scmp.eq.s32.totalorder %s17, 0
    %p167 = por %p165, %p166
    %p168 = scmp.ne.s32.totalorder %s154, %s155
    %p169 = scmp.eq.s32.totalorder %s18, 2
    %p170 = por %p168, %p169
    %p172 = scmp.ne.s32.totalorder %s155, %s171
    %p173 = scmp.eq.s32.totalorder %s18, 0
    %p174 = por %p172, %p173
    %p175 = scmp.le.s32.totalorder 1, %s12
    %p176 = scmp.lt.s32.totalorder %s12, 4
    %p177 = pnand %p175, %p176
    %p178 = pneg %p177
    // Predicated region
    $region9: #{regression_head.1} parent=5 // pred_check
      _
    $region10: #{regression_head.1} parent=5 // pred_check_branch
      %180 = sbr.rel (%p177) target = $region12
    $region11: #{regression_head.1} parent=5 // pred_region
      %s181 = ssub.s32 %s12, 1
      // Predicated region
      $region13: #{regression_head.1} parent=11 // pred_check
        %p182 = pneg %p78
      $region14: #{regression_head.1} parent=11 // pred_check_branch
        %184 = sbr.rel (%p182) target = $region16
      $region15: #{regression_head.1} parent=11 // pred_region
        %p185 = scmp.lt.s32.totalorder %s22, 0
        %s186 = scalar_select %p185, %s22, 0
        %s187 = smul.addr %s186, 4
        %s188 = scalar_lea.vmem %s1, %s187
      $region16: #{regression_head.1} parent=11 // pred_fallthru
        _
      // Predicated region
      $region17: #{regression_head.1} parent=11 // pred_check
        %p189 = pneg %p99
      $region18: #{regression_head.1} parent=11 // pred_check_branch
        %191 = sbr.rel (%p189) target = $region20
      $region19: #{regression_head.1} parent=11 // pred_region
        _
      $region20: #{regression_head.1} parent=11 // pred_fallthru
        _
      // Predicated region
      $region21: #{regression_head.1} parent=11 // pred_check
        %p192 = pneg %p120
      $region22: #{regression_head.1} parent=11 // pred_check_branch
        %194 = sbr.rel (%p192) target = $region24
      $region23: #{regression_head.1} parent=11 // pred_region
        _
      $region24: #{regression_head.1} parent=11 // pred_fallthru
        _
      // Predicated region
      $region25: #{regression_head.1} parent=11 // pred_check
        %p195 = pneg %p141
      $region26: #{regression_head.1} parent=11 // pred_check_branch
        %197 = sbr.rel (%p195) target = $region28
      $region27: #{regression_head.1} parent=11 // pred_region
        _
      $region28: #{regression_head.1} parent=11 // pred_fallthru
        _
    $region12: #{regression_head.1} parent=5 // pred_fallthru
      _
    %p198 = scmp.lt.s32.totalorder %s12, 3
    // Predicated region
    $region29: #{regression_head.1} parent=5 // pred_check
      %p199 = pneg %p198
    $region30: #{regression_head.1} parent=5 // pred_check_branch
      %201 = sbr.rel (%p199) target = $region32
    $region31: #{regression_head.1} parent=5 // pred_region
      // Predicated region
      $region33: #{regression_head.1} parent=31 // pred_check
        %p202 = pneg %p46
      $region34: #{regression_head.1} parent=31 // pred_check_branch
        %204 = sbr.rel (%p202) target = $region36
      $region35: #{regression_head.1} parent=31 // pred_region
        %s205 = smul.u32 2, %s19
        %s206 = ssub.s32 5, %s205
        %p207 = scmp.lt.s32.totalorder %s206, 2
        %s208 = scalar_select %p207, %s206, 2
        %s209 = smul.u32 128, %s208
        %p210 = scmp.lt.s32.totalorder %s205, 4
        %s211 = scalar_select %p210, %s205, 4
        %p212 = scmp.lt.s32.totalorder %s20, 0
        %s213 = scalar_select %p212, %s20, 0
        %s214 = sadd.s32 %s213, %s211
        %s215 = smul.addr %s214, 8
        %s216 = scalar_lea.vmem %s0, %s215
        %s217 = smul.u32 2, %s19
        %s218 = ssub.s32 5, %s217
        %p219 = scmp.lt.s32.totalorder %s218, 2
        %s220 = scalar_select %p219, %s218, 2
        %s221 = smul.u32 128, %s220
      $region36: #{regression_head.1} parent=31 // pred_fallthru
        _
    $region32: #{regression_head.1} parent=5 // pred_fallthru
      _
    %p222 = scmp.le.s32.totalorder 1, %s12
    %p223 = scmp.lt.s32.totalorder %s12, 4
    %p224 = pnand %p222, %p223
    %p225 = pneg %p224
    // Predicated region
    $region37: #{regression_head.1} parent=5 // pred_check
      _
    $region38: #{regression_head.1} parent=5 // pred_check_branch
      %227 = sbr.rel (%p224) target = $region40
    $region39: #{regression_head.1} parent=5 // pred_region
      %s228 = ssub.s32 %s12, 1
      %s229 = smul.u32 2, %s21
      %s230 = ssub.s32 5, %s229
      %p231 = scmp.lt.s32.totalorder %s230, 2
      %s232 = scalar_select %p231, %s230, 2
      %s233 = smul.u32 128, %s232
      %p234 = scmp.lt.s32.totalorder %s229, 4
      %s235 = scalar_select %p234, %s229, 4
      %p236 = scmp.lt.s32.totalorder %s22, 0
      %s237 = scalar_select %p236, %s22, 0
      %s238 = sadd.s32 %s237, %s235
      %s239 = smul.addr %s238, 8
      %s240 = scalar_lea.vmem %s0, %s239
      %p241 = pneg %p52
      %p242 = pneg %p49
      %p243 = scmp.lt.s32.totalorder %s22, 0
      %s244 = scalar_select %p243, %s22, 0
      %s245 = smul.addr %s244, 4
      %s246 = scalar_lea.vmem %s1, %s245
      %p247 = pneg %p78
      %p248 = pneg %p75
      %p249 = pneg %p99
      %p250 = pneg %p96
      %p251 = pneg %p120
      %p252 = pneg %p117
      %p253 = pneg %p141
      %p254 = pneg %p138
      %p255 = pneg %p167
      %p256 = pneg %p164
      %p257 = scmp.lt.s32.totalorder %s21, 2
      %s258 = scalar_select %p257, %s21, 2
      %s259 = scalar_lea.vmem %s5, %s258
      %s260 = smul.u32 2, %s21
      %s261 = ssub.s32 5, %s260
      %p262 = scmp.lt.s32.totalorder %s261, 2
      %s263 = scalar_select %p262, %s261, 2
      %s264 = smul.u32 128, %s263
      %p265 = scmp.lt.s32.totalorder %s260, 4
      %s266 = scalar_select %p265, %s260, 4
      %p267 = scmp.lt.s32.totalorder %s22, 0
      %s268 = scalar_select %p267, %s22, 0
      %s269 = sadd.s32 %s268, %s266
      %s270 = smul.addr %s269, 8
      %s271 = scalar_lea.vmem %s0, %s270
      %s272 = smul.u32 2, %s21
      %s273 = ssub.s32 5, %s272
      %p274 = scmp.lt.s32.totalorder %s273, 2
      %s275 = scalar_select %p274, %s273, 2
      %s276 = smul.u32 128, %s275
      %p277 = scmp.lt.s32.totalorder %s22, 0
      %s278 = scalar_select %p277, %s22, 0
      %s279 = smul.addr %s278, 4
      %s280 = scalar_lea.vmem %s1, %s279
      %p281 = scmp.lt.s32.totalorder %s21, 2
      %s282 = scalar_select %p281, %s21, 2
      %s283 = scalar_lea.vmem %s5, %s282
      %p285 = scmp.eq.s32.totalorder %s22, 0
      // Predicated region
      $region41: #{regression_head.1} parent=39 // pred_check
        %p286 = pneg %p285
      $region42: #{regression_head.1} parent=39 // pred_check_branch
        %288 = sbr.rel (%p286) target = $region44
      $region43: #{regression_head.1} parent=39 // pred_region
        %289 = vst [vmem:[#allocation2] sm:$0xff] 0.0
        %290 = vst [vmem:[#allocation2 + $0x8] sm:$0xff] 0.0
      $region44: #{regression_head.1} parent=39 // pred_fallthru
        _
      %v291 = vld [vmem:[#allocation2] sm:$0xff]
      %v292 = vld [vmem:[#allocation2 + $0x8] sm:$0xff]
      %v293 = vld [vmem:[%s271] sm:$0xff]
      %v294 = vld [vmem:[%s271 + $0x8] sm:$0xff]
      %v295 = vpack.c.bf16 %v294, %v293
      %v296 = vld [vmem:[%s280] sm:$0xf]
      %v297 = vld [vmem:[%s280 + $0x4] sm:$0xf]
      %v298 = vld [vmem:[%s280 + $0x8] sm:$0xf]
      %v299 = vld [vmem:[%s280 + $0xc] sm:$0xf]
      %v304 = vunpack.c.l.b16 %v296
      %v305 = vunpack.c.l.b16 %v297
      %v306 = vunpack.c.l.b16 %v298
      %v307 = vunpack.c.l.b16 %v299
      %v308 = vpack.c.b16 %v305, %v304
      %v309 = vpack.c.b16 %v307, %v306
      %vm312 = vcmask 261120
      %v314 = vsel %vm312, %v295, 0
      %316 = vmatprep.subr.bf16.mxu0 0
      %317 = vmatpush1.bf16.msra.mxu0 %v308
      %318 = vmatprep.subr.bf16.mxu0 0
      %319 = vmatpush1.bf16.msra.mxu0 %v309
      %320 = vmatprep.subr.bf16.mxu0 0
      %321 = vmatpush1.bf16.msra.mxu0 0
      %322 = vmatprep.subr.bf16.mxu0 0
      %323 = vmatpush1.bf16.msra.mxu0 0
      %324 = vmatprep.subr.bf16.mxu0 0
      %325 = vmatpush1.bf16.msra.mxu0 0
      %326 = vmatprep.subr.bf16.mxu0 0
      %327 = vmatpush1.bf16.msra.mxu0 0
      %328 = vmatprep.subr.bf16.mxu0 0
      %329 = vmatpush1.bf16.msra.mxu0 0
      %330 = vmatprep.subr.bf16.mxu0 0
      %331 = vmatpush1.bf16.msra.mxu0 0
      %332 = vmatprep.subr.bf16.mxu0 0
      %333 = vmatpush1.bf16.msra.mxu0 0
      %334 = vmatprep.subr.bf16.mxu0 0
      %335 = vmatpush1.bf16.msra.mxu0 0
      %336 = vmatprep.subr.bf16.mxu0 0
      %337 = vmatpush1.bf16.msra.mxu0 0
      %338 = vmatprep.subr.bf16.mxu0 0
      %339 = vmatpush1.bf16.msra.mxu0 0
      %340 = vmatprep.subr.bf16.mxu0 0
      %341 = vmatpush1.bf16.msra.mxu0 0
      %342 = vmatprep.subr.bf16.mxu0 0
      %343 = vmatpush1.bf16.msra.mxu0 0
      %344 = vmatprep.subr.bf16.mxu0 0
      %345 = vmatpush1.bf16.msra.mxu0 0
      %346 = vmatprep.subr.bf16.mxu0 0
      %347 = vmatpush1.bf16.msra.mxu0 0
      %348 = vmatprep.mubr.bf16.mxu0 0
      %349 = vmatmul.mubr.bf16.gmra.mrb[0].mxu0 %v314
      %v350 = vpop.f32.mrb[0].mxu0
      %v351 = vadd.f32 0.0, %v350
      %v352 = vpop.f32.mrb[0].mxu0
      %v353 = vpop.f32.mrb[0].mxu0
      %v354 = vadd.f32 0.0, %v353
      %v355 = vpop.f32.mrb[0].mxu0
      %356 = vdwg.mxu0
      %v357 = vadd.f32 %v291, %v351
      %v358 = vadd.f32 %v292, %v354
      %359 = vst [vmem:[#allocation2] sm:$0xff] %v357
      %360 = vst [vmem:[#allocation2 + $0x8] sm:$0xff] %v358
      // Predicated region
      $region45: #{regression_head.1} parent=39 // pred_check
        %p361 = pneg %p285
      $region46: #{regression_head.1} parent=39 // pred_check_branch
        %363 = sbr.rel (%p361) target = $region48
      $region47: #{regression_head.1} parent=39 // pred_region
        %v364 = vld [vmem:[#allocation2] sm:$0xff]
        %v365 = vld [vmem:[#allocation2 + $0x8] sm:$0xff]
        %v366 = vld [vmem:[%s2] sm:$0x1]
        %v368 = vlaneseq
        %v369 = vshrl.u32 %v368, 7
        %v370 = vsub.s32 0, %v369
        %v371 = vrot.slane %v366, %v370
        %v373 = vadd.f32 %v364, %v371
        %v374 = vadd.f32 %v365, %v371
        %v375 = vmax.f32 %v373, 0.0
        %v376 = vmax.f32 %v374, 0.0
        %v377 = vld [vmem:[%s3] sm:$0x1]
        %s378 = sld [smem:[#allocation3]]
        %v379 = vstv %s378
        %380 = vmatprep.subr.mxu0 0.0
        %381 = vmatpush1.xpose.msra.mxu0 %v375
        %382 = vmatprep.subr.mxu0 0.0
        %383 = vmatpush1.xpose.msra.mxu0 %v376
        %384 = vmatprep.subr.mxu0 0.0
        %385 = vmatpush1.xpose.msra.mxu0 0.0
        %386 = vmatprep.subr.mxu0 0.0
        %387 = vmatpush1.xpose.msra.mxu0 0.0
        %388 = vmatprep.subr.mxu0 0.0
        %389 = vmatpush1.xpose.msra.mxu0 0.0
        %390 = vmatprep.subr.mxu0 0.0
        %391 = vmatpush1.xpose.msra.mxu0 0.0
        %392 = vmatprep.subr.mxu0 0.0
        %393 = vmatpush1.xpose.msra.mxu0 0.0
        %394 = vmatprep.subr.mxu0 0.0
        %395 = vmatpush1.xpose.msra.mxu0 0.0
        %396 = vmatprep.subr.mxu0 0.0
        %397 = vmatpush1.xpose.msra.mxu0 0.0
        %398 = vmatprep.subr.mxu0 0.0
        %399 = vmatpush1.xpose.msra.mxu0 0.0
        %400 = vmatprep.subr.mxu0 0.0
        %401 = vmatpush1.xpose.msra.mxu0 0.0
        %402 = vmatprep.subr.mxu0 0.0
        %403 = vmatpush1.xpose.msra.mxu0 0.0
        %404 = vmatprep.subr.mxu0 0.0
        %405 = vmatpush1.xpose.msra.mxu0 0.0
        %406 = vmatprep.subr.mxu0 0.0
        %407 = vmatpush1.xpose.msra.mxu0 0.0
        %408 = vmatprep.subr.mxu0 0.0
        %409 = vmatpush1.xpose.msra.mxu0 0.0
        %410 = vmatprep.subr.mxu0 0.0
        %411 = vmatpush1.xpose.msra.mxu0 0.0
        %412 = vmatprep.subr.mxu0 0.0
        %413 = vmatpush1.xpose.msra.mxu0 0.0
        %414 = vmatprep.subr.mxu0 0.0
        %415 = vmatpush1.xpose.msra.mxu0 0.0
        %416 = vmatprep.subr.mxu0 0.0
        %417 = vmatpush1.xpose.msra.mxu0 0.0
        %418 = vmatprep.subr.mxu0 0.0
        %419 = vmatpush1.xpose.msra.mxu0 0.0
        %420 = vmatprep.subr.mxu0 0.0
        %421 = vmatpush1.xpose.msra.mxu0 0.0
        %422 = vmatprep.subr.mxu0 0.0
        %423 = vmatpush1.xpose.msra.mxu0 0.0
        %424 = vmatprep.subr.mxu0 0.0
        %425 = vmatpush1.xpose.msra.mxu0 0.0
        %426 = vmatprep.subr.mxu0 0.0
        %427 = vmatpush1.xpose.msra.mxu0 0.0
        %428 = vmatprep.subr.mxu0 0.0
        %429 = vmatpush1.xpose.msra.mxu0 0.0
        %430 = vmatprep.subr.mxu0 0.0
        %431 = vmatpush1.xpose.msra.mxu0 0.0
        %432 = vmatprep.subr.mxu0 0.0
        %433 = vmatpush1.xpose.msra.mxu0 0.0
        %434 = vmatprep.subr.mxu0 0.0
        %435 = vmatpush1.xpose.msra.mxu0 0.0
        %436 = vmatprep.subr.mxu0 0.0
        %437 = vmatpush1.xpose.msra.mxu0 0.0
        %438 = vmatprep.subr.mxu0 0.0
        %439 = vmatpush1.xpose.msra.mxu0 0.0
        %440 = vmatprep.subr.mxu0 0.0
        %441 = vmatpush1.xpose.msra.mxu0 0.0
        %442 = vmatprep.subr.mxu0 0.0
        %443 = vmatpush1.xpose.msra.mxu0 0.0
        %444 = vmatprep.mubr.f32.mxu0 0.0
        %445 = vmatmul.mubr.f32.gmra.mrb[0].mxu0 %v377
        %v446 = vpop.f32.mrb[0].mxu0
        %v447 = vadd.f32 %v379, %v446
        %v448 = vpop.f32.mrb[0].mxu0
        %449 = vdwg.mxu0
        %vm450 = vcmask 122880
        %451 = vst.msk [vmem:[%s283] sm:$0x1] %vm450, %v447
      $region48: #{regression_head.1} parent=39 // pred_fallthru
        _
      %p452 = scmp.lt.s32.totalorder %s21, 2
      %s453 = scalar_select %p452, %s21, 2
      %s454 = scalar_lea.vmem %s5, %s453
      // Predicated region
      $region49: #{regression_head.1} parent=39 // pred_check
        %p455 = pneg %p164
      $region50: #{regression_head.1} parent=39 // pred_check_branch
        %457 = sbr.rel (%p455) target = $region52
      $region51: #{regression_head.1} parent=39 // pred_region
        _
      $region52: #{regression_head.1} parent=39 // pred_fallthru
        _
    $region40: #{regression_head.1} parent=5 // pred_fallthru
      _
    %p458 = scmp.le.s32.totalorder 2, %s12
    // Predicated region
    $region53: #{regression_head.1} parent=5 // pred_check
      %p459 = pneg %p458
    $region54: #{regression_head.1} parent=5 // pred_check_branch
      %461 = sbr.rel (%p459) target = $region56
    $region55: #{regression_head.1} parent=5 // pred_region
      %s462 = ssub.s32 %s12, 2
      // Predicated region
      $region57: #{regression_head.1} parent=55 // pred_check
        %p463 = pneg %p170
      $region58: #{regression_head.1} parent=55 // pred_check_branch
        %465 = sbr.rel (%p463) target = $region60
      $region59: #{regression_head.1} parent=55 // pred_region
        %p466 = scmp.lt.s32.totalorder %s23, 2
        %s467 = scalar_select %p466, %s23, 2
        %s468 = scalar_lea.vmem %s5, %s467
      $region60: #{regression_head.1} parent=55 // pred_fallthru
        _
    $region56: #{regression_head.1} parent=5 // pred_fallthru
      _
  $region6: #{regression_head.1} parent=0 // loop_footer
    %s16 = sadd.s32 1, %s12
  $region7: #{regression_head.1} parent=0 // loop_footer_branch
    %11 = sbr.rel target = $region3
  $region8: #{regression_head.1} parent=0 // loop_exit
    _

</llo_original>
